<compile_context>
chip_gen: v7x
topology: tpu7x:2x2x1
jax: 0.10.0
libtpu: 0.0.40
codegen_flags: <defaults>
</compile_context>

<pallas_src>
import functools

import jax
import jax.numpy as jnp
from jax.experimental import pallas as pl
from jax.experimental.pallas import tpu as pltpu


_MXU_GRANULE = 256  # v6e/v7x MXU tile; also a multiple of v5e's 128.


def _round_up(x, m):
    return ((x + m - 1) // m) * m


def _transition_kernel(s_ref, w1_ref, b1_ref, w2_ref, b2_ref, w3_ref, b3_ref,
                       o_ref):
    """One row-tile of the transition layer.

    s_ref : [tile_n, C]   input tile (also the residual)
    wK_ref: [C, C]        K-th linear weight, pre-transposed (W.T), MXU dtype
    bK_ref: [1, C]        K-th linear bias (f32)
    o_ref : [tile_n, C]   output tile
    """
    mxu_dtype = w1_ref.dtype          # bf16 by default, f32 for the exact path
    s0 = s_ref[...]

    # MXU operands in mxu_dtype, accumulation in f32; bias/ReLU/residual in f32.
    x = jnp.dot(s0.astype(mxu_dtype), w1_ref[...],
                preferred_element_type=jnp.float32)
    x = jnp.maximum(x + b1_ref[...].astype(jnp.float32), 0.0)

    x = jnp.dot(x.astype(mxu_dtype), w2_ref[...],
                preferred_element_type=jnp.float32)
    x = jnp.maximum(x + b2_ref[...].astype(jnp.float32), 0.0)

    x = jnp.dot(x.astype(mxu_dtype), w3_ref[...],
                preferred_element_type=jnp.float32)
    x = x + b3_ref[...].astype(jnp.float32)

    o_ref[...] = (x + s0.astype(jnp.float32)).astype(o_ref.dtype)


def _vmem_capacity_bytes():
    try:
        return int(pltpu.get_tpu_info().vmem_capacity_bytes)
    except Exception:
        return 64 * 1024 * 1024  # conservative fallback: v7x per-TC VMEM


def _choose_tile_n(n_rows, c, act_itemsize, w_itemsize, vmem_cap):
    """Row-tile: as large as useful, VMEM-budgeted, MXU-aligned, grid >= 2-4."""
    budget = int(vmem_cap * 0.6)  # headroom for compiler scratch
    weights_bytes = 3 * 2 * (c * c * w_itemsize + c * 4)   # dbl-buffered W.T + f32 bias
    per_row = 2 * 2 * c * act_itemsize + 3 * c * 4         # dbl-buffered in/out + f32 temps
    max_rows = max(8, (budget - weights_bytes) // per_row)
    tile = min(1024, int(max_rows))

    # Never let one tile swallow the whole problem when there's enough work:
    # >= 4 grid steps when possible (>= 2 minimum) so DMA overlaps compute and
    # (on v7x) the "parallel" grid axis feeds both TensorCores.
    if n_rows >= 4 * _MXU_GRANULE:
        tile = min(tile, _round_up(pl.cdiv(n_rows, 4), _MXU_GRANULE))
    elif n_rows >= 2 * _MXU_GRANULE:
        tile = min(tile, _round_up(pl.cdiv(n_rows, 2), _MXU_GRANULE))
    else:
        tile = min(tile, _round_up(n_rows, 8))

    # MXU-granule rounding (256 also satisfies v5e's 128); fall back to 128/8.
    if tile >= _MXU_GRANULE:
        tile = (tile // _MXU_GRANULE) * _MXU_GRANULE
    elif tile >= 128:
        tile = (tile // 128) * 128
    else:
        tile = max(8, (tile // 8) * 8)
    return int(tile)


@functools.partial(jax.jit, static_argnames=("tile_n", "matmul_dtype"))
def structure_module_transition_layer(s, params, *, tile_n=None,
                                      matmul_dtype=jnp.bfloat16):
    """Pallas implementation of StructureModuleTransitionLayer.forward.

    s:            [..., C] activations (any number of leading dims).
    params:       dict with w1,b1,w2,b2,w3,b3; wK is [C, C] (torch layout:
                  out_features x in_features), bK is [C].
    matmul_dtype: MXU operand dtype (bf16 default; f32 for bit-exact path).
    """
    orig_shape = s.shape
    c = orig_shape[-1]
    s2d = s.reshape(-1, c)
    n = s2d.shape[0]

    act_itemsize = jnp.dtype(s.dtype).itemsize
    w_dtype = jnp.dtype(matmul_dtype)
    vmem_cap = _vmem_capacity_bytes()

    if tile_n is None:
        tile_n = _choose_tile_n(n, c, act_itemsize, w_dtype.itemsize, vmem_cap)

    # Pre-transpose (Linear does x @ W.T + b) and cast weights to the MXU
    # operand dtype in the wrapper; biases stay f32 (added on the f32 path).
    w1t = params["w1"].T.astype(w_dtype)
    w2t = params["w2"].T.astype(w_dtype)
    w3t = params["w3"].T.astype(w_dtype)
    b1 = params["b1"].reshape(1, c).astype(jnp.float32)
    b2 = params["b2"].reshape(1, c).astype(jnp.float32)
    b3 = params["b3"].reshape(1, c).astype(jnp.float32)

    # No jnp.pad round-trip: cdiv grid; Pallas clamps/masks the ragged edge block.
    grid = (pl.cdiv(n, tile_n),)

    act_spec = pl.BlockSpec((tile_n, c), lambda i: (i, 0))
    weight_spec = pl.BlockSpec((c, c), lambda i: (0, 0))   # resident across grid
    bias_spec = pl.BlockSpec((1, c), lambda i: (0, 0))

    cost = pl.CostEstimate(
        flops=3 * 2 * n * c * c,
        transcendentals=0,
        bytes_accessed=(2 * n * c * act_itemsize
                        + 3 * c * c * w_dtype.itemsize
                        + 3 * c * 4),
    )

    # VMEM limit from the real footprint with 2x headroom, capped well below
    # chip capacity (64 MiB/TC on v7x, 128 MiB on v5e/v6e).
    weights_bytes = 3 * 2 * (c * c * w_dtype.itemsize + c * 4)
    act_bytes = tile_n * (2 * 2 * c * act_itemsize + 3 * c * 4)
    footprint = weights_bytes + act_bytes
    vmem_limit = int(min(0.75 * vmem_cap, max(32 * 1024 * 1024, 2 * footprint)))

    out = pl.pallas_call(
        _transition_kernel,
        out_shape=jax.ShapeDtypeStruct((n, c), s.dtype),
        grid_spec=pltpu.PrefetchScalarGridSpec(
            num_scalar_prefetch=0,
            grid=grid,
            in_specs=[
                act_spec,                 # s
                weight_spec, bias_spec,   # linear_1
                weight_spec, bias_spec,   # linear_2
                weight_spec, bias_spec,   # linear_3
            ],
            out_specs=act_spec,
        ),
        compiler_params=pltpu.CompilerParams(
            dimension_semantics=("parallel",),
            vmem_limit_bytes=vmem_limit,
        ),
        cost_estimate=cost,
    )(s2d, w1t, b1, w2t, b2, w3t, b3)

    return out.reshape(orig_shape)


def _reference(s, params, matmul_dtype=jnp.float32):
    """Plain-JAX reference matching the PyTorch forward (configurable MXU dtype)."""
    md = jnp.dtype(matmul_dtype)

    def linear(x, w, b):
        y = jnp.dot(x.astype(md), w.T.astype(md),
                    preferred_element_type=jnp.float32)
        return y + b.astype(jnp.float32)

    x = jnp.maximum(linear(s, params["w1"], params["b1"]), 0.0)
    x = jnp.maximum(linear(x, params["w2"], params["b2"]), 0.0)
    x = linear(x, params["w3"], params["b3"])
    return (x + s.astype(jnp.float32)).astype(s.dtype)


if __name__ == "__main__":
    c = 32          # hidden size of the transition layer
    batch, seq = 2, 8

    key = jax.random.PRNGKey(0)
    keys = jax.random.split(key, 7)

    # Deterministic synthetic parameters (torch nn.Linear shapes: [out, in], [out]).
    scale = 1.0 / jnp.sqrt(c)
    params = {
        "w1": jax.random.normal(keys[0], (c, c), jnp.float32) * scale,
        "b1": jax.random.normal(keys[1], (c,), jnp.float32) * 0.1,
        "w2": jax.random.normal(keys[2], (c, c), jnp.float32) * scale,
        "b2": jax.random.normal(keys[3], (c,), jnp.float32) * 0.1,
        "w3": jax.random.normal(keys[4], (c, c), jnp.float32) * scale,
        "b3": jax.random.normal(keys[5], (c,), jnp.float32) * 0.1,
    }

    # Input s: [batch, seq, c] (the PyTorch module applies Linear over the last dim).
    s = jax.random.normal(keys[6], (batch, seq, c), jnp.float32)

    # Default path: bf16 MXU operands, f32 accumulation.
    out = jax.block_until_ready(structure_module_transition_layer(s, params))
    assert out.shape == s.shape
    ref_bf16 = _reference(s, params, matmul_dtype=jnp.bfloat16)
    ref_f32 = _reference(s, params, matmul_dtype=jnp.float32)
    assert jnp.allclose(out, ref_bf16, atol=1e-2, rtol=1e-2), "mismatch vs bf16 reference"
    assert jnp.allclose(out, ref_f32, atol=1e-1, rtol=1e-1), "mismatch vs f32 reference"

    # Exact path: f32 MXU operands must match the f32 reference tightly.
    out_f32 = jax.block_until_ready(
        structure_module_transition_layer(s, params, matmul_dtype=jnp.float32))
    assert jnp.allclose(out_f32, ref_f32, atol=1e-5, rtol=1e-5), "mismatch (f32 path)"

    # Non-divisible row count with an explicit small tile: exercises the ragged
    # (masked) edge block instead of a jnp.pad HBM round-trip.
    s_big = jax.random.normal(keys[6], (3, 37, c), jnp.float32)
    out_big = jax.block_until_ready(
        structure_module_transition_layer(s_big, params, tile_n=64,
                                          matmul_dtype=jnp.float32))
    ref_big = _reference(s_big, params, matmul_dtype=jnp.float32)
    assert jnp.allclose(out_big, ref_big, atol=1e-5, rtol=1e-5), "mismatch (edge block)"

    print("KERNEL_OK")
</pallas_src>

<mosaic_0001>
module attributes {stable_mosaic.version = 11 : i64} {
  func.func @_transition_kernel(%arg0: i32, %arg1: memref<16x32xf32, #tpu.memory_space<vmem>>, %arg2: memref<32x32xbf16, #tpu.memory_space<vmem>>, %arg3: memref<1x32xf32, #tpu.memory_space<vmem>>, %arg4: memref<32x32xbf16, #tpu.memory_space<vmem>>, %arg5: memref<1x32xf32, #tpu.memory_space<vmem>>, %arg6: memref<32x32xbf16, #tpu.memory_space<vmem>>, %arg7: memref<1x32xf32, #tpu.memory_space<vmem>>, %arg8: memref<16x32xf32, #tpu.memory_space<vmem>>) attributes {dimension_semantics = [#tpu.dimension_semantics<parallel>], iteration_bounds = array<i64: 1>, scalar_prefetch = 0 : i64, scratch_operands = 0 : i64, tpu.core_type = #tpu.core_type<tc>, window_params = [{transform_indices = @transform_0, window_bounds = array<i64: 16, 32>}, {pipeline_mode = #tpu.pipeline_mode<synchronous>, transform_indices = @transform_1, window_bounds = array<i64: 32, 32>}, {pipeline_mode = #tpu.pipeline_mode<synchronous>, transform_indices = @transform_2, window_bounds = array<i64: 1, 32>}, {pipeline_mode = #tpu.pipeline_mode<synchronous>, transform_indices = @transform_3, window_bounds = array<i64: 32, 32>}, {pipeline_mode = #tpu.pipeline_mode<synchronous>, transform_indices = @transform_4, window_bounds = array<i64: 1, 32>}, {pipeline_mode = #tpu.pipeline_mode<synchronous>, transform_indices = @transform_5, window_bounds = array<i64: 32, 32>}, {pipeline_mode = #tpu.pipeline_mode<synchronous>, transform_indices = @transform_6, window_bounds = array<i64: 1, 32>}, {transform_indices = @transform_7, window_bounds = array<i64: 16, 32>}]} {
    %c0 = arith.constant 0 : index
    %c0_0 = arith.constant 0 : index
    %0 = vector.load %arg1[%c0, %c0_0] : memref<16x32xf32, #tpu.memory_space<vmem>>, vector<16x32xf32>
    %1 = arith.truncf %0 : vector<16x32xf32> to vector<16x32xbf16>
    %c0_1 = arith.constant 0 : index
    %c0_2 = arith.constant 0 : index
    %2 = vector.load %arg2[%c0_1, %c0_2] : memref<32x32xbf16, #tpu.memory_space<vmem>>, vector<32x32xbf16>
    %cst = arith.constant dense<0.000000e+00> : vector<16x32xf32>
    %3 = tpu.matmul %1, %2, %cst {dimension_numbers = #tpu.dot_dimension_numbers<[1], [0], [0], [1], [0, 0, 1, 1], [], []>} : vector<16x32xbf16>, vector<32x32xbf16>, vector<16x32xf32> -> vector<16x32xf32>
    %c0_3 = arith.constant 0 : index
    %c0_4 = arith.constant 0 : index
    %4 = vector.load %arg3[%c0_3, %c0_4] : memref<1x32xf32, #tpu.memory_space<vmem>>, vector<1x32xf32>
    %5 = vector.broadcast %4 : vector<1x32xf32> to vector<16x32xf32>
    %6 = arith.addf %3, %5 : vector<16x32xf32>
    %cst_5 = arith.constant 0.000000e+00 : f32
    %7 = vector.broadcast %cst_5 : f32 to vector<16x32xf32>
    %8 = arith.maximumf %6, %7 : vector<16x32xf32>
    %9 = arith.truncf %8 : vector<16x32xf32> to vector<16x32xbf16>
    %c0_6 = arith.constant 0 : index
    %c0_7 = arith.constant 0 : index
    %10 = vector.load %arg4[%c0_6, %c0_7] : memref<32x32xbf16, #tpu.memory_space<vmem>>, vector<32x32xbf16>
    %cst_8 = arith.constant dense<0.000000e+00> : vector<16x32xf32>
    %11 = tpu.matmul %9, %10, %cst_8 {dimension_numbers = #tpu.dot_dimension_numbers<[1], [0], [0], [1], [0, 0, 1, 1], [], []>} : vector<16x32xbf16>, vector<32x32xbf16>, vector<16x32xf32> -> vector<16x32xf32>
    %c0_9 = arith.constant 0 : index
    %c0_10 = arith.constant 0 : index
    %12 = vector.load %arg5[%c0_9, %c0_10] : memref<1x32xf32, #tpu.memory_space<vmem>>, vector<1x32xf32>
    %13 = vector.broadcast %12 : vector<1x32xf32> to vector<16x32xf32>
    %14 = arith.addf %11, %13 : vector<16x32xf32>
    %cst_11 = arith.constant 0.000000e+00 : f32
    %15 = vector.broadcast %cst_11 : f32 to vector<16x32xf32>
    %16 = arith.maximumf %14, %15 : vector<16x32xf32>
    %17 = arith.truncf %16 : vector<16x32xf32> to vector<16x32xbf16>
    %c0_12 = arith.constant 0 : index
    %c0_13 = arith.constant 0 : index
    %18 = vector.load %arg6[%c0_12, %c0_13] : memref<32x32xbf16, #tpu.memory_space<vmem>>, vector<32x32xbf16>
    %cst_14 = arith.constant dense<0.000000e+00> : vector<16x32xf32>
    %19 = tpu.matmul %17, %18, %cst_14 {dimension_numbers = #tpu.dot_dimension_numbers<[1], [0], [0], [1], [0, 0, 1, 1], [], []>} : vector<16x32xbf16>, vector<32x32xbf16>, vector<16x32xf32> -> vector<16x32xf32>
    %c0_15 = arith.constant 0 : index
    %c0_16 = arith.constant 0 : index
    %20 = vector.load %arg7[%c0_15, %c0_16] : memref<1x32xf32, #tpu.memory_space<vmem>>, vector<1x32xf32>
    %21 = vector.broadcast %20 : vector<1x32xf32> to vector<16x32xf32>
    %22 = arith.addf %19, %21 : vector<16x32xf32>
    %23 = arith.addf %22, %0 : vector<16x32xf32>
    %c0_17 = arith.constant 0 : index
    %c0_18 = arith.constant 0 : index
    %24 = vector.load %arg8[%c0_17, %c0_18] : memref<16x32xf32, #tpu.memory_space<vmem>>, vector<16x32xf32>
    tpu.vector_store %arg8[%c0_17, %c0_18], %23 {strides = array<i32>} : memref<16x32xf32, #tpu.memory_space<vmem>>, vector<16x32xf32>,
    return
  }
  func.func @transform_0(%arg0: i32) -> (i32, i32) {
    %c0_i32 = arith.constant 0 : i32
    %c0_i32_0 = arith.constant 0 : i32
    return %arg0, %c0_i32 : i32, i32
  }
  func.func @transform_1(%arg0: i32) -> (i32, i32) {
    %c0_i32 = arith.constant 0 : i32
    %c0_i32_0 = arith.constant 0 : i32
    %c0_i32_1 = arith.constant 0 : i32
    return %c0_i32, %c0_i32_0 : i32, i32
  }
  func.func @transform_2(%arg0: i32) -> (i32, i32) {
    %c0_i32 = arith.constant 0 : i32
    %c0_i32_0 = arith.constant 0 : i32
    %c0_i32_1 = arith.constant 0 : i32
    return %c0_i32, %c0_i32_0 : i32, i32
  }
  func.func @transform_3(%arg0: i32) -> (i32, i32) {
    %c0_i32 = arith.constant 0 : i32
    %c0_i32_0 = arith.constant 0 : i32
    %c0_i32_1 = arith.constant 0 : i32
    return %c0_i32, %c0_i32_0 : i32, i32
  }
  func.func @transform_4(%arg0: i32) -> (i32, i32) {
    %c0_i32 = arith.constant 0 : i32
    %c0_i32_0 = arith.constant 0 : i32
    %c0_i32_1 = arith.constant 0 : i32
    return %c0_i32, %c0_i32_0 : i32, i32
  }
  func.func @transform_5(%arg0: i32) -> (i32, i32) {
    %c0_i32 = arith.constant 0 : i32
    %c0_i32_0 = arith.constant 0 : i32
    %c0_i32_1 = arith.constant 0 : i32
    return %c0_i32, %c0_i32_0 : i32, i32
  }
  func.func @transform_6(%arg0: i32) -> (i32, i32) {
    %c0_i32 = arith.constant 0 : i32
    %c0_i32_0 = arith.constant 0 : i32
    %c0_i32_1 = arith.constant 0 : i32
    return %c0_i32, %c0_i32_0 : i32, i32
  }
  func.func @transform_7(%arg0: i32) -> (i32, i32) {
    %c0_i32 = arith.constant 0 : i32
    %c0_i32_0 = arith.constant 0 : i32
    return %arg0, %c0_i32 : i32, i32
  }
}

</mosaic_0001>

<llo_original>
// kernel: structure_module_transition_layer.1
$region0: #{structure_module_transition_layer.1}
  #allocation0 [shape = 'u32[]', space=smem, size = 0x4, offset = 0x4, fixed_abs, tag = 'smem constant byte address 0x4 - core index']
  #allocation1 [shape = 'u32[144,128]{1,0:T(1,128)}', space=vmem, size = 0x12000, scoped, tag = 'internal scratch']
  %s0 = inlined_call_operand.vmem [shape: f32[16,32], index: 0, kind: input, shape index: {}]
  %s1 = inlined_call_operand.vmem [shape: bf16[32,32], index: 1, kind: input, shape index: {}]
  %s2 = inlined_call_operand.vmem [shape: f32[1,32], index: 2, kind: input, shape index: {}]
  %s3 = inlined_call_operand.vmem [shape: bf16[32,32], index: 3, kind: input, shape index: {}]
  %s4 = inlined_call_operand.vmem [shape: f32[1,32], index: 4, kind: input, shape index: {}]
  %s5 = inlined_call_operand.vmem [shape: bf16[32,32], index: 5, kind: input, shape index: {}]
  %s6 = inlined_call_operand.vmem [shape: f32[1,32], index: 6, kind: input, shape index: {}]
  %s7 = inlined_call_operand.hbm [shape: f32[16,32], index: 7, kind: output, shape index: {}]
  %s8 = sld [smem:[#allocation0]]
  $region38: #{structure_module_transition_layer.1} parent=0
    _
  %s10 = ssub.s32 1, %s8
  %s11 = scalar_select 0, %s10, %s8
  $region1: #{structure_module_transition_layer.1} parent=0
    #allocation2 [shape = 'u8[8192]{0}', space=vmem, size = 0x2000, scoped, tag = 'output window, operand 0, single buffered']
    #allocation3 [shape = 's32[1]{0}', space=sflag, size = 0x4, scoped, tag = 'scoped memory for structure_module_transition_layer.1']
    %12 = vsyncpa [#allocation3], 0
    // Predicated region
    $region2: #{structure_module_transition_layer.1} parent=1 // pred_check
      _
    $region3: #{structure_module_transition_layer.1} parent=1 // pred_check_branch
      %14 = sbr.rel (0) target = $region5
    $region4: #{structure_module_transition_layer.1} parent=1 // pred_region
      _
    $region5: #{structure_module_transition_layer.1} parent=1 // pred_fallthru
      _
    // Predicated region
    $region6: #{structure_module_transition_layer.1} parent=1 // pred_check
      _
    $region7: #{structure_module_transition_layer.1} parent=1 // pred_check_branch
      %16 = sbr.rel (0) target = $region9
    $region8: #{structure_module_transition_layer.1} parent=1 // pred_region
      _
    $region9: #{structure_module_transition_layer.1} parent=1 // pred_fallthru
      _
    // Predicated region
    $region10: #{structure_module_transition_layer.1} parent=1 // pred_check
      _
    $region11: #{structure_module_transition_layer.1} parent=1 // pred_check_branch
      %18 = sbr.rel (0) target = $region13
    $region12: #{structure_module_transition_layer.1} parent=1 // pred_region
      _
    $region13: #{structure_module_transition_layer.1} parent=1 // pred_fallthru
      _
    // Predicated region
    $region14: #{structure_module_transition_layer.1} parent=1 // pred_check
      _
    $region15: #{structure_module_transition_layer.1} parent=1 // pred_check_branch
      %20 = sbr.rel (0) target = $region17
    $region16: #{structure_module_transition_layer.1} parent=1 // pred_region
      _
    $region17: #{structure_module_transition_layer.1} parent=1 // pred_fallthru
      _
    // Predicated region
    $region18: #{structure_module_transition_layer.1} parent=1 // pred_check
      _
    $region19: #{structure_module_transition_layer.1} parent=1 // pred_check_branch
      %22 = sbr.rel (0) target = $region21
    $region20: #{structure_module_transition_layer.1} parent=1 // pred_region
      _
    $region21: #{structure_module_transition_layer.1} parent=1 // pred_fallthru
      _
    // Predicated region
    $region22: #{structure_module_transition_layer.1} parent=1 // pred_check
      _
    $region23: #{structure_module_transition_layer.1} parent=1 // pred_check_branch
      %24 = sbr.rel (0) target = $region25
    $region24: #{structure_module_transition_layer.1} parent=1 // pred_region
      _
    $region25: #{structure_module_transition_layer.1} parent=1 // pred_fallthru
      _
    // Predicated region
    $region26: #{structure_module_transition_layer.1} parent=1 // pred_check
      _
    $region27: #{structure_module_transition_layer.1} parent=1 // pred_check_branch
      %26 = sbr.rel (0) target = $region29
    $region28: #{structure_module_transition_layer.1} parent=1 // pred_region
      _
    $region29: #{structure_module_transition_layer.1} parent=1 // pred_fallthru
      _
    %v28 = vld [vmem:[%s0] sm:$0xff]
    %v29 = vld [vmem:[%s0 + $0x8] sm:$0xff]
    %v30 = vpack.c.bf16 %v29, %v28
    %v31 = vld [vmem:[%s1] sm:$0xf]
    %v32 = vld [vmem:[%s1 + $0x4] sm:$0xf]
    %v33 = vld [vmem:[%s1 + $0x8] sm:$0xf]
    %v34 = vld [vmem:[%s1 + $0xc] sm:$0xf]
    %v35 = vld [vmem:[%s2] sm:$0x1]
    %v37 = vlaneseq
    %v38 = vshrl.u32 %v37, 7
    %v39 = vsub.s32 0, %v38
    %v40 = vrot.slane %v35, %v39
    %v46 = vunpack.c.l.b16 %v31
    %v47 = vunpack.c.l.b16 %v32
    %v48 = vunpack.c.l.b16 %v33
    %v49 = vunpack.c.l.b16 %v34
    %v50 = vpack.c.b16 %v47, %v46
    %v51 = vpack.c.b16 %v49, %v48
    %vm54 = vcmask 261120
    %v56 = vsel %vm54, %v30, 0
    %58 = vmatprep.subr.bf16.mxu0 0
    %59 = vmatpush1.bf16.msra.mxu0 %v50
    %60 = vmatprep.subr.bf16.mxu0 0
    %61 = vmatpush1.bf16.msra.mxu0 %v51
    %62 = vmatprep.subr.bf16.mxu0 0
    %63 = vmatpush1.bf16.msra.mxu0 0
    %64 = vmatprep.subr.bf16.mxu0 0
    %65 = vmatpush1.bf16.msra.mxu0 0
    %66 = vmatprep.subr.bf16.mxu0 0
    %67 = vmatpush1.bf16.msra.mxu0 0
    %68 = vmatprep.subr.bf16.mxu0 0
    %69 = vmatpush1.bf16.msra.mxu0 0
    %70 = vmatprep.subr.bf16.mxu0 0
    %71 = vmatpush1.bf16.msra.mxu0 0
    %72 = vmatprep.subr.bf16.mxu0 0
    %73 = vmatpush1.bf16.msra.mxu0 0
    %74 = vmatprep.subr.bf16.mxu0 0
    %75 = vmatpush1.bf16.msra.mxu0 0
    %76 = vmatprep.subr.bf16.mxu0 0
    %77 = vmatpush1.bf16.msra.mxu0 0
    %78 = vmatprep.subr.bf16.mxu0 0
    %79 = vmatpush1.bf16.msra.mxu0 0
    %80 = vmatprep.subr.bf16.mxu0 0
    %81 = vmatpush1.bf16.msra.mxu0 0
    %82 = vmatprep.subr.bf16.mxu0 0
    %83 = vmatpush1.bf16.msra.mxu0 0
    %84 = vmatprep.subr.bf16.mxu0 0
    %85 = vmatpush1.bf16.msra.mxu0 0
    %86 = vmatprep.subr.bf16.mxu0 0
    %87 = vmatpush1.bf16.msra.mxu0 0
    %88 = vmatprep.subr.bf16.mxu0 0
    %89 = vmatpush1.bf16.msra.mxu0 0
    %90 = vmatprep.mubr.bf16.mxu0 0
    %91 = vmatmul.mubr.bf16.gmra.mrb[0].mxu0 %v56
    %v92 = vpop.f32.mrb[0].mxu0
    %v93 = vadd.f32 %v40, %v92
    %v94 = vpop.f32.mrb[0].mxu0
    %v95 = vpop.f32.mrb[0].mxu0
    %v96 = vadd.f32 %v40, %v95
    %v97 = vpop.f32.mrb[0].mxu0
    %98 = vdwg.mxu0
    %v99 = vmax.f32 %v93, 0.0
    %v100 = vmax.f32 %v96, 0.0
    %v101 = vpack.c.bf16 %v100, %v99
    %v102 = vld [vmem:[%s3] sm:$0xf]
    %v103 = vld [vmem:[%s3 + $0x4] sm:$0xf]
    %v104 = vld [vmem:[%s3 + $0x8] sm:$0xf]
    %v105 = vld [vmem:[%s3 + $0xc] sm:$0xf]
    %v106 = vld [vmem:[%s4] sm:$0x1]
    %v108 = vlaneseq
    %v109 = vshrl.u32 %v108, 7
    %v110 = vsub.s32 0, %v109
    %v111 = vrot.slane %v106, %v110
    %v117 = vunpack.c.l.b16 %v102
    %v118 = vunpack.c.l.b16 %v103
    %v119 = vunpack.c.l.b16 %v104
    %v120 = vunpack.c.l.b16 %v105
    %v121 = vpack.c.b16 %v118, %v117
    %v122 = vpack.c.b16 %v120, %v119
    %v126 = vsel %vm54, %v101, 0
    %128 = vmatprep.subr.bf16.mxu0 0
    %129 = vmatpush1.bf16.msra.mxu0 %v121
    %130 = vmatprep.subr.bf16.mxu0 0
    %131 = vmatpush1.bf16.msra.mxu0 %v122
    %132 = vmatprep.subr.bf16.mxu0 0
    %133 = vmatpush1.bf16.msra.mxu0 0
    %134 = vmatprep.subr.bf16.mxu0 0
    %135 = vmatpush1.bf16.msra.mxu0 0
    %136 = vmatprep.subr.bf16.mxu0 0
    %137 = vmatpush1.bf16.msra.mxu0 0
    %138 = vmatprep.subr.bf16.mxu0 0
    %139 = vmatpush1.bf16.msra.mxu0 0
    %140 = vmatprep.subr.bf16.mxu0 0
    %141 = vmatpush1.bf16.msra.mxu0 0
    %142 = vmatprep.subr.bf16.mxu0 0
    %143 = vmatpush1.bf16.msra.mxu0 0
    %144 = vmatprep.subr.bf16.mxu0 0
    %145 = vmatpush1.bf16.msra.mxu0 0
    %146 = vmatprep.subr.bf16.mxu0 0
    %147 = vmatpush1.bf16.msra.mxu0 0
    %148 = vmatprep.subr.bf16.mxu0 0
    %149 = vmatpush1.bf16.msra.mxu0 0
    %150 = vmatprep.subr.bf16.mxu0 0
    %151 = vmatpush1.bf16.msra.mxu0 0
    %152 = vmatprep.subr.bf16.mxu0 0
    %153 = vmatpush1.bf16.msra.mxu0 0
    %154 = vmatprep.subr.bf16.mxu0 0
    %155 = vmatpush1.bf16.msra.mxu0 0
    %156 = vmatprep.subr.bf16.mxu0 0
    %157 = vmatpush1.bf16.msra.mxu0 0
    %158 = vmatprep.subr.bf16.mxu0 0
    %159 = vmatpush1.bf16.msra.mxu0 0
    %160 = vmatprep.mubr.bf16.mxu0 0
    %161 = vmatmul.mubr.bf16.gmra.mrb[0].mxu0 %v126
    %v162 = vpop.f32.mrb[0].mxu0
    %v163 = vadd.f32 %v111, %v162
    %v164 = vpop.f32.mrb[0].mxu0
    %v165 = vpop.f32.mrb[0].mxu0
    %v166 = vadd.f32 %v111, %v165
    %v167 = vpop.f32.mrb[0].mxu0
    %168 = vdwg.mxu0
    %v169 = vmax.f32 %v163, 0.0
    %v170 = vmax.f32 %v166, 0.0
    %v171 = vpack.c.bf16 %v170, %v169
    %v172 = vld [vmem:[%s5] sm:$0xf]
    %v173 = vld [vmem:[%s5 + $0x4] sm:$0xf]
    %v174 = vld [vmem:[%s5 + $0x8] sm:$0xf]
    %v175 = vld [vmem:[%s5 + $0xc] sm:$0xf]
    %v176 = vld [vmem:[%s6] sm:$0x1]
    %v178 = vlaneseq
    %v179 = vshrl.u32 %v178, 7
    %v180 = vsub.s32 0, %v179
    %v181 = vrot.slane %v176, %v180
    %v187 = vunpack.c.l.b16 %v172
    %v188 = vunpack.c.l.b16 %v173
    %v189 = vunpack.c.l.b16 %v174
    %v190 = vunpack.c.l.b16 %v175
    %v191 = vpack.c.b16 %v188, %v187
    %v192 = vpack.c.b16 %v190, %v189
    %v196 = vsel %vm54, %v171, 0
    %198 = vmatprep.subr.bf16.mxu0 0
    %199 = vmatpush1.bf16.msra.mxu0 %v191
    %200 = vmatprep.subr.bf16.mxu0 0
    %201 = vmatpush1.bf16.msra.mxu0 %v192
    %202 = vmatprep.subr.bf16.mxu0 0
    %203 = vmatpush1.bf16.msra.mxu0 0
    %204 = vmatprep.subr.bf16.mxu0 0
    %205 = vmatpush1.bf16.msra.mxu0 0
    %206 = vmatprep.subr.bf16.mxu0 0
    %207 = vmatpush1.bf16.msra.mxu0 0
    %208 = vmatprep.subr.bf16.mxu0 0
    %209 = vmatpush1.bf16.msra.mxu0 0
    %210 = vmatprep.subr.bf16.mxu0 0
    %211 = vmatpush1.bf16.msra.mxu0 0
    %212 = vmatprep.subr.bf16.mxu0 0
    %213 = vmatpush1.bf16.msra.mxu0 0
    %214 = vmatprep.subr.bf16.mxu0 0
    %215 = vmatpush1.bf16.msra.mxu0 0
    %216 = vmatprep.subr.bf16.mxu0 0
    %217 = vmatpush1.bf16.msra.mxu0 0
    %218 = vmatprep.subr.bf16.mxu0 0
    %219 = vmatpush1.bf16.msra.mxu0 0
    %220 = vmatprep.subr.bf16.mxu0 0
    %221 = vmatpush1.bf16.msra.mxu0 0
    %222 = vmatprep.subr.bf16.mxu0 0
    %223 = vmatpush1.bf16.msra.mxu0 0
    %224 = vmatprep.subr.bf16.mxu0 0
    %225 = vmatpush1.bf16.msra.mxu0 0
    %226 = vmatprep.subr.bf16.mxu0 0
    %227 = vmatpush1.bf16.msra.mxu0 0
    %228 = vmatprep.subr.bf16.mxu0 0
    %229 = vmatpush1.bf16.msra.mxu0 0
    %230 = vmatprep.mubr.bf16.mxu0 0
    %231 = vmatmul.mubr.bf16.gmra.mrb[0].mxu0 %v196
    %v232 = vpop.f32.mrb[0].mxu0
    %v233 = vadd.f32 %v181, %v232
    %v234 = vpop.f32.mrb[0].mxu0
    %v235 = vpop.f32.mrb[0].mxu0
    %v236 = vadd.f32 %v181, %v235
    %v237 = vpop.f32.mrb[0].mxu0
    %238 = vdwg.mxu0
    %v239 = vadd.f32 %v233, %v28
    %v240 = vadd.f32 %v236, %v29
    %241 = vst.msk [vmem:[#allocation2] sm:$0xff] %vm54, %v239
    %242 = vst.msk [vmem:[#allocation2 + $0x8] sm:$0xff] %vm54, %v240
    // Predicated region
    $region30: #{structure_module_transition_layer.1} parent=1 // pred_check
      _
    $region31: #{structure_module_transition_layer.1} parent=1 // pred_check_branch
      %244 = sbr.rel (0) target = $region33
    $region32: #{structure_module_transition_layer.1} parent=1 // pred_region
      %s246 = ssub.s32 256, 256
      %247 = vsyncadd [#allocation3], %s246
      %s248 = sshll.u32 [#allocation2], 4
      %s249 = int_to_ptr.vmem [resolvable:$true] %s248
      %254 = dma.vmem_to_hbm [thread:$0]  %s249, 256, %s7, [#allocation3], 128, 128, 8
    $region33: #{structure_module_transition_layer.1} parent=1 // pred_fallthru
      _
    // Predicated region
    $region34: #{structure_module_transition_layer.1} parent=1 // pred_check
      _
    $region35: #{structure_module_transition_layer.1} parent=1 // pred_check_branch
      %256 = sbr.rel (0) target = $region37
    $region36: #{structure_module_transition_layer.1} parent=1 // pred_region
      %257 = dma.done [#allocation3], 256
    $region37: #{structure_module_transition_layer.1} parent=1 // pred_fallthru
      _
    %258 = vsyncpa [#allocation3], 1

</llo_original>
